<compile_context>
chip_gen: v6e
topology: v6e:2x2x1
jax: 0.10.0
libtpu: 0.0.40
codegen_flags: <defaults>
</compile_context>

<pallas_src>
import numpy as np
import jax
import jax.numpy as jnp
from jax import lax
from jax.experimental import pallas as pl
from jax.experimental.pallas import tpu as pltpu

# ----------------------------- problem sizes --------------------------------
B = 2            # batch (molecules)
A = 128          # atoms per molecule
NIN = 32         # representation features (nin)
H = 50           # hidden nodes (schnetpack default 50)
NOUT = 1         # outputs per element tile (required for the PyTorch
                 # gate * net broadcast to be well-formed)
ELEMENTS = (1, 6, 8)            # e.g. H, C, O
NELEM = len(ELEMENTS)
MAXELEM = max(ELEMENTS) + 1

TM = 128         # atoms (rows) per grid step; lane axis of the activations

# MXU operand dtype (x tiles + weights).  Biases, softplus, the gated sum and
# all matmul accumulation stay f32 (preferred_element_type).  On v5e the VPU /
# EUP have no bf16 path, so only the dot operands are bf16.
MATMUL_DTYPE = jnp.bfloat16

_LOG2 = 0.6931471805599453


def _ssp(x):
    # shifted softplus, numerically stable, strictly f32
    return jnp.maximum(x, 0.0) + jnp.log1p(jnp.exp(-jnp.abs(x))) - _LOG2


# ------------------------------ Pallas kernel --------------------------------
def gated_network_kernel(tile_elem_ref,          # [T] int32 SMEM (scalar prefetch)
                         x_ref,                  # [TM, NIN]   bf16 row-major tile
                         g_ref,                  # [1, TM]     f32 gate value per atom
                         w1_ref, b1_ref,         # [1, H, NIN] bf16 / [1, H, 1] f32
                         w2_ref, b2_ref,         # [1, H, H]   bf16 / [1, H, 1] f32
                         w3_ref, b3_ref,         # [1, NOUT,H] bf16 / [1, NOUT, 1] f32
                         o_ref):                 # [1, TM]     f32
    del tile_elem_ref  # consumed only by the BlockSpec index_maps
    x = x_ref[...]

    # layer 1: contract the feature axes ([H, NIN] . [TM, NIN] -> [H, TM]) so the
    # activations live transposed (atoms on lanes) without any wrapper transpose.
    h1 = _ssp(lax.dot_general(w1_ref[0], x, (((1,), (1,)), ((), ())),
                              preferred_element_type=jnp.float32) + b1_ref[0])
    # layer 2: [H, H] @ [H, TM] -> [H, TM]
    h2 = _ssp(jnp.dot(w2_ref[0], h1.astype(MATMUL_DTYPE),
                      preferred_element_type=jnp.float32) + b2_ref[0])
    # layer 3: [NOUT, H] @ [H, TM] -> [NOUT, TM]   (NOUT == 1)
    y = jnp.dot(w3_ref[0], h2.astype(MATMUL_DTYPE),
                preferred_element_type=jnp.float32) + b3_ref[0]

    # gate value of this tile's element for each atom (1 for matching atoms,
    # 0 for out-of-set / padding atoms); [1, TM] is lane-dense -> unmasked vst.
    o_ref[...] = g_ref[...] * y


# ------------------------------ pallas_call wrapper ---------------------------
def gated_network_pallas(representation, gate, w1, b1, w2, b2, w3, b3, *, tm=TM):
    """representation: [B, A, NIN] f32, gate: [B, A, NELEM] one-hot -> [B, A, 1].

    Assumes the module's default one-hot ElementalGate (at most one non-zero
    gate entry per atom) — that is what makes element-grouped evaluation exact.
    """
    # TODO(synk): non-one-hot gates (trainable / random-embedding ElementalGate)
    # need the v2 block-diagonal fused path instead of element grouping.
    assert tm % 128 == 0
    bb, aa, nin = representation.shape
    nelem = gate.shape[-1]
    h = w1.shape[-1]
    nout = w3.shape[-1]
    n = bb * aa

    x2d = representation.reshape(n, nin)
    g2d = gate.reshape(n, nelem)

    # --- group atoms by element (argmax of the one-hot gate) ------------------
    elem = jnp.argmax(g2d, axis=-1).astype(jnp.int32)                    # [n]
    gval = jnp.take_along_axis(g2d, elem[:, None], axis=-1)[:, 0]        # [n]
    order = jnp.argsort(elem)                                            # sorted atom ids
    elem_sorted = elem[order]

    counts = jnp.bincount(elem, length=nelem).astype(jnp.int32)          # [nelem]
    tiles_per_elem = (counts + tm - 1) // tm
    blk_start = jnp.concatenate(
        [jnp.zeros((1,), jnp.int32), jnp.cumsum(tiles_per_elem)[:-1].astype(jnp.int32)])
    grp_start = (jnp.cumsum(counts) - counts).astype(jnp.int32)          # excl. cumsum

    # destination row of every atom in the tile-padded, element-grouped buffer
    pos_in_grp = jnp.arange(n, dtype=jnp.int32) - grp_start[elem_sorted]
    buf_row = blk_start[elem_sorted] * tm + pos_in_grp                   # [n]

    # static worst-case tile count (each element may have one partial tile)
    t_max = int(pl.cdiv(n, tm)) + nelem
    n_buf = t_max * tm

    x_buf = jnp.zeros((n_buf, nin), MATMUL_DTYPE).at[buf_row].set(
        x2d[order].astype(MATMUL_DTYPE))
    g_buf = jnp.zeros((1, n_buf), jnp.float32).at[0, buf_row].set(
        gval[order].astype(jnp.float32))

    # per-tile element id (scalar prefetch); unused trailing tiles -> element 0
    # (their rows are zero, their gate is zero, and they are never gathered back)
    blk_end = blk_start + tiles_per_elem
    tile_ids = jnp.arange(t_max, dtype=jnp.int32)
    tile_elem = jnp.minimum(
        jnp.sum((tile_ids[:, None] >= blk_end[None, :]).astype(jnp.int32), axis=1),
        nelem - 1).astype(jnp.int32)

    # --- stacked per-element parameters (transposed for the lane-major layout) -
    w1s = jnp.transpose(w1, (0, 2, 1)).astype(MATMUL_DTYPE)              # [NELEM, H, NIN]
    w2s = jnp.transpose(w2, (0, 2, 1)).astype(MATMUL_DTYPE)              # [NELEM, H, H]
    w3s = jnp.transpose(w3, (0, 2, 1)).astype(MATMUL_DTYPE)              # [NELEM, NOUT, H]
    b1s = b1[:, :, None].astype(jnp.float32)                             # [NELEM, H, 1]
    b2s = b2[:, :, None].astype(jnp.float32)                             # [NELEM, H, 1]
    b3s = b3[:, :, None].astype(jnp.float32)                             # [NELEM, NOUT, 1]

    out_buf = pl.pallas_call(
        gated_network_kernel,
        out_shape=jax.ShapeDtypeStruct((1, n_buf), jnp.float32),
        grid_spec=pltpu.PrefetchScalarGridSpec(
            num_scalar_prefetch=1,
            grid=(t_max,),
            in_specs=[
                pl.BlockSpec((tm, nin), lambda t, te: (t, 0)),            # x tile
                pl.BlockSpec((1, tm), lambda t, te: (0, t)),              # gate values
                pl.BlockSpec((1, h, nin), lambda t, te: (te[t], 0, 0)),   # W1[elem]
                pl.BlockSpec((1, h, 1), lambda t, te: (te[t], 0, 0)),     # b1[elem]
                pl.BlockSpec((1, h, h), lambda t, te: (te[t], 0, 0)),     # W2[elem]
                pl.BlockSpec((1, h, 1), lambda t, te: (te[t], 0, 0)),     # b2[elem]
                pl.BlockSpec((1, nout, h), lambda t, te: (te[t], 0, 0)),  # W3[elem]
                pl.BlockSpec((1, nout, 1), lambda t, te: (te[t], 0, 0)),  # b3[elem]
            ],
            out_specs=pl.BlockSpec((1, tm), lambda t, te: (0, t)),        # lane-dense row
        ),
        compiler_params=pltpu.CompilerParams(
            dimension_semantics=("parallel",)),
    )(tile_elem, x_buf, g_buf, w1s, b1s, w2s, b2s, w3s, b3s)

    # un-permute: gather each atom's result back to its original position
    out_sorted = out_buf[0, buf_row]                                      # sorted order
    out = jnp.zeros((n,), jnp.float32).at[order].set(out_sorted)
    return out.reshape(bb, aa, 1)


# ------------------------------ plain-JAX reference ---------------------------
def reference(x, gate, w1, b1, w2, b2, w3, b3):
    outs = []
    for t in range(NELEM):
        h1 = _ssp(x @ w1[t] + b1[t])
        h2 = _ssp(h1 @ w2[t] + b2[t])
        outs.append(h2 @ w3[t] + b3[t])
    net = jnp.concatenate(outs, axis=-1)            # [B, A, NELEM*NOUT]
    return jnp.sum(gate * net, axis=-1, keepdims=True)


# ------------------------------------ main ------------------------------------
if __name__ == "__main__":
    key = jax.random.PRNGKey(0)
    k_rep, k_z, k_w = jax.random.split(key, 3)

    # Inputs (SchNetPack dict: Z and 'representation')
    representation = jax.random.normal(k_rep, (B, A, NIN), dtype=jnp.float32)
    atomic_numbers = jax.random.choice(
        k_z, jnp.asarray(ELEMENTS, dtype=jnp.int32), shape=(B, A))

    # ElementalGate one-hot embedding weights: [MAXELEM, NELEM]
    gate_weight = np.zeros((MAXELEM, NELEM), dtype=np.float32)
    for idx, Z in enumerate(ELEMENTS):
        gate_weight[Z, idx] = 1.0
    gate_weight = jnp.asarray(gate_weight)

    # Per-tile MLP parameters (stacked over element tiles).
    ks = jax.random.split(k_w, 6)
    w1 = 0.1 * jax.random.normal(ks[0], (NELEM, NIN, H), dtype=jnp.float32)
    b1 = 0.1 * jax.random.normal(ks[1], (NELEM, H), dtype=jnp.float32)
    w2 = 0.1 * jax.random.normal(ks[2], (NELEM, H, H), dtype=jnp.float32)
    b2 = 0.1 * jax.random.normal(ks[3], (NELEM, H), dtype=jnp.float32)
    w3 = 0.1 * jax.random.normal(ks[4], (NELEM, H, NOUT), dtype=jnp.float32)
    b3 = 0.1 * jax.random.normal(ks[5], (NELEM, NOUT), dtype=jnp.float32)

    # Gate lookup (embedding gather) stays in plain-JAX glue.
    gate = gate_weight[atomic_numbers]              # [B, A, NELEM]

    out = gated_network_pallas(representation, gate, w1, b1, w2, b2, w3, b3)
    jax.block_until_ready(out)

    ref = reference(representation, gate, w1, b1, w2, b2, w3, b3)
    # bf16 MXU operands -> loosened tolerance vs the f32 reference.
    np.testing.assert_allclose(np.asarray(out), np.asarray(ref),
                               rtol=5e-2, atol=5e-2)
    print("KERNEL_OK")
</pallas_src>

<mosaic_0001>
module attributes {stable_mosaic.version = 11 : i64} {
  func.func @gated_network_kernel(%arg0: i32, %arg1: memref<5xi32, #tpu.memory_space<smem>>, %arg2: memref<128x32xbf16, #tpu.memory_space<vmem>>, %arg3: memref<1x128xf32, #tpu.memory_space<vmem>>, %arg4: memref<1x50x32xbf16, #tpu.memory_space<vmem>>, %arg5: memref<1x50x1xf32, #tpu.memory_space<vmem>>, %arg6: memref<1x50x50xbf16, #tpu.memory_space<vmem>>, %arg7: memref<1x50x1xf32, #tpu.memory_space<vmem>>, %arg8: memref<1x1x50xbf16, #tpu.memory_space<vmem>>, %arg9: memref<1x1x1xf32, #tpu.memory_space<vmem>>, %arg10: memref<1x128xf32, #tpu.memory_space<vmem>>) attributes {dimension_semantics = [#tpu.dimension_semantics<parallel>], iteration_bounds = array<i64: 5>, scalar_prefetch = 1 : i64, scratch_operands = 0 : i64, tpu.core_type = #tpu.core_type<tc>, window_params = [{transform_indices = @transform_0, window_bounds = array<i64: 128, 32>}, {transform_indices = @transform_1, window_bounds = array<i64: 1, 128>}, {transform_indices = @transform_2, window_bounds = array<i64: 1, 50, 32>}, {transform_indices = @transform_3, window_bounds = array<i64: 1, 50, 1>}, {transform_indices = @transform_4, window_bounds = array<i64: 1, 50, 50>}, {transform_indices = @transform_5, window_bounds = array<i64: 1, 50, 1>}, {transform_indices = @transform_6, window_bounds = array<i64: 1, 1, 50>}, {transform_indices = @transform_7, window_bounds = array<i64: 1, 1, 1>}, {transform_indices = @transform_8, window_bounds = array<i64: 1, 128>}]} {
    %c0 = arith.constant 0 : index
    %c0_0 = arith.constant 0 : index
    %0 = vector.load %arg2[%c0, %c0_0] : memref<128x32xbf16, #tpu.memory_space<vmem>>, vector<128x32xbf16>
    %c0_1 = arith.constant 0 : index
    %c0_2 = arith.constant 0 : index
    %c0_3 = arith.constant 0 : index
    %1 = vector.load %arg4[%c0_1, %c0_2, %c0_3] : memref<1x50x32xbf16, #tpu.memory_space<vmem>>, vector<1x50x32xbf16>
    %2 = vector.shape_cast %1 : vector<1x50x32xbf16> to vector<50x32xbf16>
    %cst = arith.constant dense<0.000000e+00> : vector<50x128xf32>
    %3 = tpu.matmul %2, %0, %cst {dimension_numbers = #tpu.dot_dimension_numbers<[1], [1], [0], [0], [0, 0, 1, 0], [], []>} : vector<50x32xbf16>, vector<128x32xbf16>, vector<50x128xf32> -> vector<50x128xf32>
    %c0_4 = arith.constant 0 : index
    %c0_5 = arith.constant 0 : index
    %c0_6 = arith.constant 0 : index
    %4 = vector.load %arg5[%c0_4, %c0_5, %c0_6] : memref<1x50x1xf32, #tpu.memory_space<vmem>>, vector<1x50x1xf32>
    %5 = vector.shape_cast %4 : vector<1x50x1xf32> to vector<50x1xf32>
    %6 = vector.broadcast %5 : vector<50x1xf32> to vector<50x128xf32>
    %7 = arith.addf %3, %6 : vector<50x128xf32>
    %cst_7 = arith.constant 0.000000e+00 : f32
    %8 = vector.broadcast %cst_7 : f32 to vector<50x128xf32>
    %9 = arith.maximumf %7, %8 : vector<50x128xf32>
    %10 = math.absf %7 : vector<50x128xf32>
    %cst_8 = arith.constant 0.000000e+00 : f32
    %11 = vector.broadcast %cst_8 : f32 to vector<50x128xf32>
    %12 = arith.subf %11, %10 : vector<50x128xf32>
    %13 = math.exp %12 : vector<50x128xf32>
    %14 = math.log1p %13 : vector<50x128xf32>
    %15 = arith.addf %9, %14 : vector<50x128xf32>
    %cst_9 = arith.constant 0.693147182 : f32
    %16 = vector.broadcast %cst_9 : f32 to vector<50x128xf32>
    %17 = arith.subf %15, %16 : vector<50x128xf32>
    %c0_10 = arith.constant 0 : index
    %c0_11 = arith.constant 0 : index
    %c0_12 = arith.constant 0 : index
    %18 = vector.load %arg6[%c0_10, %c0_11, %c0_12] : memref<1x50x50xbf16, #tpu.memory_space<vmem>>, vector<1x50x50xbf16>
    %19 = vector.shape_cast %18 : vector<1x50x50xbf16> to vector<50x50xbf16>
    %20 = arith.truncf %17 : vector<50x128xf32> to vector<50x128xbf16>
    %cst_13 = arith.constant dense<0.000000e+00> : vector<50x128xf32>
    %21 = tpu.matmul %19, %20, %cst_13 {dimension_numbers = #tpu.dot_dimension_numbers<[1], [0], [0], [1], [0, 0, 1, 1], [], []>} : vector<50x50xbf16>, vector<50x128xbf16>, vector<50x128xf32> -> vector<50x128xf32>
    %c0_14 = arith.constant 0 : index
    %c0_15 = arith.constant 0 : index
    %c0_16 = arith.constant 0 : index
    %22 = vector.load %arg7[%c0_14, %c0_15, %c0_16] : memref<1x50x1xf32, #tpu.memory_space<vmem>>, vector<1x50x1xf32>
    %23 = vector.shape_cast %22 : vector<1x50x1xf32> to vector<50x1xf32>
    %24 = vector.broadcast %23 : vector<50x1xf32> to vector<50x128xf32>
    %25 = arith.addf %21, %24 : vector<50x128xf32>
    %cst_17 = arith.constant 0.000000e+00 : f32
    %26 = vector.broadcast %cst_17 : f32 to vector<50x128xf32>
    %27 = arith.maximumf %25, %26 : vector<50x128xf32>
    %28 = math.absf %25 : vector<50x128xf32>
    %cst_18 = arith.constant 0.000000e+00 : f32
    %29 = vector.broadcast %cst_18 : f32 to vector<50x128xf32>
    %30 = arith.subf %29, %28 : vector<50x128xf32>
    %31 = math.exp %30 : vector<50x128xf32>
    %32 = math.log1p %31 : vector<50x128xf32>
    %33 = arith.addf %27, %32 : vector<50x128xf32>
    %cst_19 = arith.constant 0.693147182 : f32
    %34 = vector.broadcast %cst_19 : f32 to vector<50x128xf32>
    %35 = arith.subf %33, %34 : vector<50x128xf32>
    %c0_20 = arith.constant 0 : index
    %c0_21 = arith.constant 0 : index
    %c0_22 = arith.constant 0 : index
    %36 = vector.load %arg8[%c0_20, %c0_21, %c0_22] : memref<1x1x50xbf16, #tpu.memory_space<vmem>>, vector<1x1x50xbf16>
    %37 = vector.shape_cast %36 : vector<1x1x50xbf16> to vector<1x50xbf16>
    %38 = arith.truncf %35 : vector<50x128xf32> to vector<50x128xbf16>
    %cst_23 = arith.constant dense<0.000000e+00> : vector<1x128xf32>
    %39 = tpu.matmul %37, %38, %cst_23 {dimension_numbers = #tpu.dot_dimension_numbers<[1], [0], [0], [1], [0, 0, 1, 1], [], []>} : vector<1x50xbf16>, vector<50x128xbf16>, vector<1x128xf32> -> vector<1x128xf32>
    %c0_24 = arith.constant 0 : index
    %c0_25 = arith.constant 0 : index
    %c0_26 = arith.constant 0 : index
    %40 = vector.load %arg9[%c0_24, %c0_25, %c0_26] : memref<1x1x1xf32, #tpu.memory_space<vmem>>, vector<1x1x1xf32>
    %41 = vector.shape_cast %40 : vector<1x1x1xf32> to vector<1x1xf32>
    %42 = vector.broadcast %41 : vector<1x1xf32> to vector<1x128xf32>
    %43 = arith.addf %39, %42 : vector<1x128xf32>
    %c0_27 = arith.constant 0 : index
    %c0_28 = arith.constant 0 : index
    %44 = vector.load %arg3[%c0_27, %c0_28] : memref<1x128xf32, #tpu.memory_space<vmem>>, vector<1x128xf32>
    %45 = arith.mulf %44, %43 : vector<1x128xf32>
    %c0_29 = arith.constant 0 : index
    %c0_30 = arith.constant 0 : index
    %46 = vector.load %arg10[%c0_29, %c0_30] : memref<1x128xf32, #tpu.memory_space<vmem>>, vector<1x128xf32>
    tpu.vector_store %arg10[%c0_29, %c0_30], %45 {strides = array<i32>} : memref<1x128xf32, #tpu.memory_space<vmem>>, vector<1x128xf32>,
    return
  }
  func.func @transform_0(%arg0: i32, %arg1: memref<5xi32, #tpu.memory_space<smem>>) -> (i32, i32) {
    %c0_i32 = arith.constant 0 : i32
    %c0_i32_0 = arith.constant 0 : i32
    return %arg0, %c0_i32 : i32, i32
  }
  func.func @transform_1(%arg0: i32, %arg1: memref<5xi32, #tpu.memory_space<smem>>) -> (i32, i32) {
    %c0_i32 = arith.constant 0 : i32
    %c0_i32_0 = arith.constant 0 : i32
    return %c0_i32, %arg0 : i32, i32
  }
  func.func @transform_2(%arg0: i32, %arg1: memref<5xi32, #tpu.memory_space<smem>>) -> (i32, i32, i32) {
    %0 = arith.index_cast %arg0 : i32 to index
    %1 = memref.load %arg1[%0] : memref<5xi32, #tpu.memory_space<smem>>
    %c0_i32 = arith.constant 0 : i32
    %c0_i32_0 = arith.constant 0 : i32
    %c0_i32_1 = arith.constant 0 : i32
    return %1, %c0_i32, %c0_i32_0 : i32, i32, i32
  }
  func.func @transform_3(%arg0: i32, %arg1: memref<5xi32, #tpu.memory_space<smem>>) -> (i32, i32, i32) {
    %0 = arith.index_cast %arg0 : i32 to index
    %1 = memref.load %arg1[%0] : memref<5xi32, #tpu.memory_space<smem>>
    %c0_i32 = arith.constant 0 : i32
    %c0_i32_0 = arith.constant 0 : i32
    %c0_i32_1 = arith.constant 0 : i32
    return %1, %c0_i32, %c0_i32_0 : i32, i32, i32
  }
  func.func @transform_4(%arg0: i32, %arg1: memref<5xi32, #tpu.memory_space<smem>>) -> (i32, i32, i32) {
    %0 = arith.index_cast %arg0 : i32 to index
    %1 = memref.load %arg1[%0] : memref<5xi32, #tpu.memory_space<smem>>
    %c0_i32 = arith.constant 0 : i32
    %c0_i32_0 = arith.constant 0 : i32
    %c0_i32_1 = arith.constant 0 : i32
    return %1, %c0_i32, %c0_i32_0 : i32, i32, i32
  }
  func.func @transform_5(%arg0: i32, %arg1: memref<5xi32, #tpu.memory_space<smem>>) -> (i32, i32, i32) {
    %0 = arith.index_cast %arg0 : i32 to index
    %1 = memref.load %arg1[%0] : memref<5xi32, #tpu.memory_space<smem>>
    %c0_i32 = arith.constant 0 : i32
    %c0_i32_0 = arith.constant 0 : i32
    %c0_i32_1 = arith.constant 0 : i32
    return %1, %c0_i32, %c0_i32_0 : i32, i32, i32
  }
  func.func @transform_6(%arg0: i32, %arg1: memref<5xi32, #tpu.memory_space<smem>>) -> (i32, i32, i32) {
    %0 = arith.index_cast %arg0 : i32 to index
    %1 = memref.load %arg1[%0] : memref<5xi32, #tpu.memory_space<smem>>
    %c0_i32 = arith.constant 0 : i32
    %c0_i32_0 = arith.constant 0 : i32
    %c0_i32_1 = arith.constant 0 : i32
    return %1, %c0_i32, %c0_i32_0 : i32, i32, i32
  }
  func.func @transform_7(%arg0: i32, %arg1: memref<5xi32, #tpu.memory_space<smem>>) -> (i32, i32, i32) {
    %0 = arith.index_cast %arg0 : i32 to index
    %1 = memref.load %arg1[%0] : memref<5xi32, #tpu.memory_space<smem>>
    %c0_i32 = arith.constant 0 : i32
    %c0_i32_0 = arith.constant 0 : i32
    %c0_i32_1 = arith.constant 0 : i32
    return %1, %c0_i32, %c0_i32_0 : i32, i32, i32
  }
  func.func @transform_8(%arg0: i32, %arg1: memref<5xi32, #tpu.memory_space<smem>>) -> (i32, i32) {
    %c0_i32 = arith.constant 0 : i32
    %c0_i32_0 = arith.constant 0 : i32
    return %c0_i32, %arg0 : i32, i32
  }
}

</mosaic_0001>

<llo_original>
// kernel: tpu_custom_call.1
$region0: #{tpu_custom_call.1}
  #allocation0 [shape = 'u32[]', space=smem, size = 0x4, offset = 0x4, fixed_abs, tag = 'smem constant byte address 0x4 - core index']
  #allocation1 [shape = 'u32[144,128]{1,0:T(1,128)}', space=vmem, size = 0x12000, scoped, tag = 'internal scratch']
  #allocation2 [shape = 's32[1]{0}', space=sflag, size = 0x4, scoped, tag = 'scoped memory for tpu_custom_call.1']
  #allocation3 [shape = 'u8[512]{0}', space=smem, size = 0x200, scoped, tag = 'prefetched SMEM operand 0']
  %s0 = inlined_call_operand.vmem [shape: s32[5], index: 0, kind: input, shape index: {}]
  %s1 = inlined_call_operand.vmem [shape: bf16[640,32], index: 1, kind: input, shape index: {}]
  %s2 = inlined_call_operand.vmem [shape: f32[1,640], index: 2, kind: input, shape index: {}]
  %s3 = inlined_call_operand.vmem [shape: bf16[3,50,32], index: 3, kind: input, shape index: {}]
  %s4 = inlined_call_operand.vmem [shape: f32[3,50,1], index: 4, kind: input, shape index: {}]
  %s5 = inlined_call_operand.vmem [shape: bf16[3,50,50], index: 5, kind: input, shape index: {}]
  %s6 = inlined_call_operand.vmem [shape: f32[3,50,1], index: 6, kind: input, shape index: {}]
  %s7 = inlined_call_operand.vmem [shape: bf16[3,1,50], index: 7, kind: input, shape index: {}]
  %s8 = inlined_call_operand.vmem [shape: f32[3,1,1], index: 8, kind: input, shape index: {}]
  %s9 = inlined_call_operand.hbm [shape: f32[1,640], index: 9, kind: output, shape index: {}]
  %s10 = sld [smem:[#allocation0]]
  $region65: #{tpu_custom_call.1} parent=0
    _
  %s12 = ssub.s32 1, %s10
  %s13 = scalar_select 0, %s12, %s10
  %s14 = sshll.u32 %s0, 4
  %s15 = int_to_ptr.vmem [resolvable:$true] %s14
  %17 = dma.vmem_to_smem %s15, 16, [#allocation3], [#allocation2]
  %18 = dma.done [#allocation2], 16
  %19 = sfence
  $region1: #{tpu_custom_call.1} parent=0
    #allocation4 [shape = 'u8[1024]{0}', space=vmem, size = 0x400, scoped, tag = 'output window, operand 0']
    #allocation5 [shape = 's32[2]{0}', space=sflag, size = 0x8, scoped, tag = 'scoped memory for tpu_custom_call.1']
    %20 = vsyncpa [#allocation5], 0
    %s21 = scalar_lea.sflag [#allocation5], 1
    %22 = vsyncpa %s21, 0
    loop: start=0, step=1, limit=7
    $region2: #{tpu_custom_call.1} parent=1 // loop_pre_header
      _
    $region3: #{tpu_custom_call.1} parent=1 // loop_header
      %s24 = sphi 0, %s28
      %p25 = scmp.ge.s32.totalorder %s24, 7
      %s34 = sphi 0, %s36
      %s37 = sphi 0, %s34
      %s38 = sphi 0, %s37
      %s54 = sphi 0, %s38
      %s60 = sphi 0, %s62
      %s63 = sphi 0, %s60
      %s64 = sphi 0, %s63
      %s80 = sphi 0, %s64
      %s88 = sphi 0, %s90
      %s91 = sphi 0, %s88
      %s92 = sphi 0, %s91
      %s108 = sphi 0, %s92
      %s116 = sphi 0, %s118
      %s119 = sphi 0, %s116
      %s120 = sphi 0, %s119
      %s136 = sphi 0, %s120
      %s144 = sphi 0, %s146
      %s147 = sphi 0, %s144
      %s148 = sphi 0, %s147
      %s164 = sphi 0, %s148
      %s172 = sphi 0, %s174
      %s175 = sphi 0, %s172
      %s176 = sphi 0, %s175
      %s192 = sphi 0, %s176
      %s200 = sphi 0, %s202
      %s203 = sphi 0, %s200
      %s204 = sphi 0, %s203
      %s220 = sphi 0, %s204
      %s228 = sphi 0, %s230
      %s231 = sphi 0, %s228
      %s232 = sphi 0, %s231
      %s248 = sphi 0, %s232
      %s254 = sphi 0, %s256
      %s257 = sphi 0, %s254
      %s258 = sphi 0, %s257
      %s274 = sphi 0, %s258
    $region4: #{tpu_custom_call.1} parent=1 // loop_header_branch
      %27 = sbr.rel (%p25) target = $region8
    $region5: #{tpu_custom_call.1} parent=1 // loop_body
      %s29 = ssub.s32 %s24, 1
      %s30 = ssub.s32 %s24, 2
      %s31 = sadd.s32 %s24, 1
      %s32 = ssub.s32 %s24, %s31
      %p33 = scmp.eq.s32.totalorder %s32, 0
      %s35 = sadd.s32 %s34, 1
      %s36 = scalar_select %p33, %s34, %s35
      %p39 = pneg %p33
      %p40 = scmp.eq.s32.totalorder %s24, 4
      %p41 = por %p39, %p40
      %p42 = scmp.ne.s32.totalorder %s34, %s37
      %p43 = scmp.eq.s32.totalorder %s24, 0
      %p44 = por %p42, %p43
      %p45 = scmp.ne.s32.totalorder %s34, %s37
      %p46 = scmp.eq.s32.totalorder %s29, 4
      %p47 = por %p45, %p46
      %p48 = scmp.ne.s32.totalorder %s37, %s38
      %p49 = scmp.eq.s32.totalorder %s29, 0
      %p50 = por %p48, %p49
      %p51 = scmp.ne.s32.totalorder %s37, %s38
      %p52 = scmp.eq.s32.totalorder %s30, 4
      %p53 = por %p51, %p52
      %p55 = scmp.ne.s32.totalorder %s38, %s54
      %p56 = scmp.eq.s32.totalorder %s30, 0
      %p57 = por %p55, %p56
      %s58 = ssub.s32 %s24, %s31
      %p59 = scmp.eq.s32.totalorder %s58, 0
      %s61 = sadd.s32 %s60, 1
      %s62 = scalar_select %p59, %s60, %s61
      %p65 = pneg %p59
      %p66 = scmp.eq.s32.totalorder %s24, 4
      %p67 = por %p65, %p66
      %p68 = scmp.ne.s32.totalorder %s60, %s63
      %p69 = scmp.eq.s32.totalorder %s24, 0
      %p70 = por %p68, %p69
      %p71 = scmp.ne.s32.totalorder %s60, %s63
      %p72 = scmp.eq.s32.totalorder %s29, 4
      %p73 = por %p71, %p72
      %p74 = scmp.ne.s32.totalorder %s63, %s64
      %p75 = scmp.eq.s32.totalorder %s29, 0
      %p76 = por %p74, %p75
      %p77 = scmp.ne.s32.totalorder %s63, %s64
      %p78 = scmp.eq.s32.totalorder %s30, 4
      %p79 = por %p77, %p78
      %p81 = scmp.ne.s32.totalorder %s64, %s80
      %p82 = scmp.eq.s32.totalorder %s30, 0
      %p83 = por %p81, %p82
      %s84 = sld [smem:[#allocation3 + %s24]]
      %s85 = sld [smem:[#allocation3 + %s31]]
      %s86 = ssub.s32 %s84, %s85
      %p87 = scmp.eq.s32.totalorder %s86, 0
      %s89 = sadd.s32 %s88, 1
      %s90 = scalar_select %p87, %s88, %s89
      %p93 = pneg %p87
      %p94 = scmp.eq.s32.totalorder %s24, 4
      %p95 = por %p93, %p94
      %p96 = scmp.ne.s32.totalorder %s88, %s91
      %p97 = scmp.eq.s32.totalorder %s24, 0
      %p98 = por %p96, %p97
      %p99 = scmp.ne.s32.totalorder %s88, %s91
      %p100 = scmp.eq.s32.totalorder %s29, 4
      %p101 = por %p99, %p100
      %p102 = scmp.ne.s32.totalorder %s91, %s92
      %p103 = scmp.eq.s32.totalorder %s29, 0
      %p104 = por %p102, %p103
      %p105 = scmp.ne.s32.totalorder %s91, %s92
      %p106 = scmp.eq.s32.totalorder %s30, 4
      %p107 = por %p105, %p106
      %p109 = scmp.ne.s32.totalorder %s92, %s108
      %p110 = scmp.eq.s32.totalorder %s30, 0
      %p111 = por %p109, %p110
      %s112 = sld [smem:[#allocation3 + %s24]]
      %s113 = sld [smem:[#allocation3 + %s31]]
      %s114 = ssub.s32 %s112, %s113
      %p115 = scmp.eq.s32.totalorder %s114, 0
      %s117 = sadd.s32 %s116, 1
      %s118 = scalar_select %p115, %s116, %s117
      %p121 = pneg %p115
      %p122 = scmp.eq.s32.totalorder %s24, 4
      %p123 = por %p121, %p122
      %p124 = scmp.ne.s32.totalorder %s116, %s119
      %p125 = scmp.eq.s32.totalorder %s24, 0
      %p126 = por %p124, %p125
      %p127 = scmp.ne.s32.totalorder %s116, %s119
      %p128 = scmp.eq.s32.totalorder %s29, 4
      %p129 = por %p127, %p128
      %p130 = scmp.ne.s32.totalorder %s119, %s120
      %p131 = scmp.eq.s32.totalorder %s29, 0
      %p132 = por %p130, %p131
      %p133 = scmp.ne.s32.totalorder %s119, %s120
      %p134 = scmp.eq.s32.totalorder %s30, 4
      %p135 = por %p133, %p134
      %p137 = scmp.ne.s32.totalorder %s120, %s136
      %p138 = scmp.eq.s32.totalorder %s30, 0
      %p139 = por %p137, %p138
      %s140 = sld [smem:[#allocation3 + %s24]]
      %s141 = sld [smem:[#allocation3 + %s31]]
      %s142 = ssub.s32 %s140, %s141
      %p143 = scmp.eq.s32.totalorder %s142, 0
      %s145 = sadd.s32 %s144, 1
      %s146 = scalar_select %p143, %s144, %s145
      %p149 = pneg %p143
      %p150 = scmp.eq.s32.totalorder %s24, 4
      %p151 = por %p149, %p150
      %p152 = scmp.ne.s32.totalorder %s144, %s147
      %p153 = scmp.eq.s32.totalorder %s24, 0
      %p154 = por %p152, %p153
      %p155 = scmp.ne.s32.totalorder %s144, %s147
      %p156 = scmp.eq.s32.totalorder %s29, 4
      %p157 = por %p155, %p156
      %p158 = scmp.ne.s32.totalorder %s147, %s148
      %p159 = scmp.eq.s32.totalorder %s29, 0
      %p160 = por %p158, %p159
      %p161 = scmp.ne.s32.totalorder %s147, %s148
      %p162 = scmp.eq.s32.totalorder %s30, 4
      %p163 = por %p161, %p162
      %p165 = scmp.ne.s32.totalorder %s148, %s164
      %p166 = scmp.eq.s32.totalorder %s30, 0
      %p167 = por %p165, %p166
      %s168 = sld [smem:[#allocation3 + %s24]]
      %s169 = sld [smem:[#allocation3 + %s31]]
      %s170 = ssub.s32 %s168, %s169
      %p171 = scmp.eq.s32.totalorder %s170, 0
      %s173 = sadd.s32 %s172, 1
      %s174 = scalar_select %p171, %s172, %s173
      %p177 = pneg %p171
      %p178 = scmp.eq.s32.totalorder %s24, 4
      %p179 = por %p177, %p178
      %p180 = scmp.ne.s32.totalorder %s172, %s175
      %p181 = scmp.eq.s32.totalorder %s24, 0
      %p182 = por %p180, %p181
      %p183 = scmp.ne.s32.totalorder %s172, %s175
      %p184 = scmp.eq.s32.totalorder %s29, 4
      %p185 = por %p183, %p184
      %p186 = scmp.ne.s32.totalorder %s175, %s176
      %p187 = scmp.eq.s32.totalorder %s29, 0
      %p188 = por %p186, %p187
      %p189 = scmp.ne.s32.totalorder %s175, %s176
      %p190 = scmp.eq.s32.totalorder %s30, 4
      %p191 = por %p189, %p190
      %p193 = scmp.ne.s32.totalorder %s176, %s192
      %p194 = scmp.eq.s32.totalorder %s30, 0
      %p195 = por %p193, %p194
      %s196 = sld [smem:[#allocation3 + %s24]]
      %s197 = sld [smem:[#allocation3 + %s31]]
      %s198 = ssub.s32 %s196, %s197
      %p199 = scmp.eq.s32.totalorder %s198, 0
      %s201 = sadd.s32 %s200, 1
      %s202 = scalar_select %p199, %s200, %s201
      %p205 = pneg %p199
      %p206 = scmp.eq.s32.totalorder %s24, 4
      %p207 = por %p205, %p206
      %p208 = scmp.ne.s32.totalorder %s200, %s203
      %p209 = scmp.eq.s32.totalorder %s24, 0
      %p210 = por %p208, %p209
      %p211 = scmp.ne.s32.totalorder %s200, %s203
      %p212 = scmp.eq.s32.totalorder %s29, 4
      %p213 = por %p211, %p212
      %p214 = scmp.ne.s32.totalorder %s203, %s204
      %p215 = scmp.eq.s32.totalorder %s29, 0
      %p216 = por %p214, %p215
      %p217 = scmp.ne.s32.totalorder %s203, %s204
      %p218 = scmp.eq.s32.totalorder %s30, 4
      %p219 = por %p217, %p218
      %p221 = scmp.ne.s32.totalorder %s204, %s220
      %p222 = scmp.eq.s32.totalorder %s30, 0
      %p223 = por %p221, %p222
      %s224 = sld [smem:[#allocation3 + %s24]]
      %s225 = sld [smem:[#allocation3 + %s31]]
      %s226 = ssub.s32 %s224, %s225
      %p227 = scmp.eq.s32.totalorder %s226, 0
      %s229 = sadd.s32 %s228, 1
      %s230 = scalar_select %p227, %s228, %s229
      %p233 = pneg %p227
      %p234 = scmp.eq.s32.totalorder %s24, 4
      %p235 = por %p233, %p234
      %p236 = scmp.ne.s32.totalorder %s228, %s231
      %p237 = scmp.eq.s32.totalorder %s24, 0
      %p238 = por %p236, %p237
      %p239 = scmp.ne.s32.totalorder %s228, %s231
      %p240 = scmp.eq.s32.totalorder %s29, 4
      %p241 = por %p239, %p240
      %p242 = scmp.ne.s32.totalorder %s231, %s232
      %p243 = scmp.eq.s32.totalorder %s29, 0
      %p244 = por %p242, %p243
      %p245 = scmp.ne.s32.totalorder %s231, %s232
      %p246 = scmp.eq.s32.totalorder %s30, 4
      %p247 = por %p245, %p246
      %p249 = scmp.ne.s32.totalorder %s232, %s248
      %p250 = scmp.eq.s32.totalorder %s30, 0
      %p251 = por %p249, %p250
      %s252 = ssub.s32 %s24, %s31
      %p253 = scmp.eq.s32.totalorder %s252, 0
      %s255 = sadd.s32 %s254, 1
      %s256 = scalar_select %p253, %s254, %s255
      %p259 = pneg %p253
      %p260 = scmp.eq.s32.totalorder %s24, 4
      %p261 = por %p259, %p260
      %p262 = scmp.ne.s32.totalorder %s254, %s257
      %p263 = scmp.eq.s32.totalorder %s24, 0
      %p264 = por %p262, %p263
      %p265 = scmp.ne.s32.totalorder %s254, %s257
      %p266 = scmp.eq.s32.totalorder %s29, 4
      %p267 = por %p265, %p266
      %p268 = scmp.ne.s32.totalorder %s257, %s258
      %p269 = scmp.eq.s32.totalorder %s29, 0
      %p270 = por %p268, %p269
      %p271 = scmp.ne.s32.totalorder %s257, %s258
      %p272 = scmp.eq.s32.totalorder %s30, 4
      %p273 = por %p271, %p272
      %p275 = scmp.ne.s32.totalorder %s258, %s274
      %p276 = scmp.eq.s32.totalorder %s30, 0
      %p277 = por %p275, %p276
      %p278 = scmp.le.s32.totalorder 1, %s24
      %p279 = scmp.lt.s32.totalorder %s24, 6
      %p280 = pnand %p278, %p279
      %p281 = pneg %p280
      // Predicated region
      $region9: #{tpu_custom_call.1} parent=5 // pred_check
        _
      $region10: #{tpu_custom_call.1} parent=5 // pred_check_branch
        %283 = sbr.rel (%p280) target = $region12
      $region11: #{tpu_custom_call.1} parent=5 // pred_region
        %s284 = ssub.s32 %s24, 1
      $region12: #{tpu_custom_call.1} parent=5 // pred_fallthru
        _
      %p285 = scmp.lt.s32.totalorder %s24, 5
      // Predicated region
      $region13: #{tpu_custom_call.1} parent=5 // pred_check
        %p286 = pneg %p285
      $region14: #{tpu_custom_call.1} parent=5 // pred_check_branch
        %288 = sbr.rel (%p286) target = $region16
      $region15: #{tpu_custom_call.1} parent=5 // pred_region
        // Predicated region
        $region17: #{tpu_custom_call.1} parent=15 // pred_check
          %p289 = pneg %p44
        $region18: #{tpu_custom_call.1} parent=15 // pred_check_branch
          %291 = sbr.rel (%p289) target = $region20
        $region19: #{tpu_custom_call.1} parent=15 // pred_region
          %s292 = smul.u32 16, %s24
          %p293 = scmp.lt.s32.totalorder %s292, 79
          %s294 = scalar_select %p293, %s292, 79
          %s295 = smul.addr %s294, 4
          %s296 = scalar_lea.vmem %s1, %s295
          %s297 = smul.u32 16, %s24
        $region20: #{tpu_custom_call.1} parent=15 // pred_fallthru
          _
        // Predicated region
        $region21: #{tpu_custom_call.1} parent=15 // pred_check
          %p298 = pneg %p70
        $region22: #{tpu_custom_call.1} parent=15 // pred_check_branch
          %300 = sbr.rel (%p298) target = $region24
        $region23: #{tpu_custom_call.1} parent=15 // pred_region
          %p301 = scmp.lt.s32.totalorder %s24, 4
          %s302 = scalar_select %p301, %s24, 4
          %s303 = scalar_lea.vmem %s2, %s302
        $region24: #{tpu_custom_call.1} parent=15 // pred_fallthru
          _
        // Predicated region
        $region25: #{tpu_custom_call.1} parent=15 // pred_check
          %p304 = pneg %p98
        $region26: #{tpu_custom_call.1} parent=15 // pred_check_branch
          %306 = sbr.rel (%p304) target = $region28
        $region27: #{tpu_custom_call.1} parent=15 // pred_region
          %s307 = sld [smem:[#allocation3 + %s24]]
          %p308 = scmp.lt.s32.totalorder %s307, 2
          %s309 = scalar_select %p308, %s307, 2
          %s310 = smul.addr %s309, 7
          %s311 = smul.addr %s310, 4
          %s312 = scalar_lea.vmem %s3, %s311
          %s313 = sld [smem:[#allocation3 + %s24]]
        $region28: #{tpu_custom_call.1} parent=15 // pred_fallthru
          _
        // Predicated region
        $region29: #{tpu_custom_call.1} parent=15 // pred_check
          %p314 = pneg %p126
        $region30: #{tpu_custom_call.1} parent=15 // pred_check_branch
          %316 = sbr.rel (%p314) target = $region32
        $region31: #{tpu_custom_call.1} parent=15 // pred_region
          %s317 = sld [smem:[#allocation3 + %s24]]
          %p318 = scmp.lt.s32.totalorder %s317, 2
          %s319 = scalar_select %p318, %s317, 2
          %s320 = smul.addr %s319, 7
          %s321 = smul.addr %s320, 8
          %s322 = scalar_lea.vmem %s4, %s321
          %s323 = sld [smem:[#allocation3 + %s24]]
        $region32: #{tpu_custom_call.1} parent=15 // pred_fallthru
          _
        // Predicated region
        $region33: #{tpu_custom_call.1} parent=15 // pred_check
          %p324 = pneg %p154
        $region34: #{tpu_custom_call.1} parent=15 // pred_check_branch
          %326 = sbr.rel (%p324) target = $region36
        $region35: #{tpu_custom_call.1} parent=15 // pred_region
          %s327 = sld [smem:[#allocation3 + %s24]]
          %p328 = scmp.lt.s32.totalorder %s327, 2
          %s329 = scalar_select %p328, %s327, 2
          %s330 = smul.addr %s329, 7
          %s331 = smul.addr %s330, 4
          %s332 = scalar_lea.vmem %s5, %s331
          %s333 = sld [smem:[#allocation3 + %s24]]
        $region36: #{tpu_custom_call.1} parent=15 // pred_fallthru
          _
        // Predicated region
        $region37: #{tpu_custom_call.1} parent=15 // pred_check
          %p334 = pneg %p182
        $region38: #{tpu_custom_call.1} parent=15 // pred_check_branch
          %336 = sbr.rel (%p334) target = $region40
        $region39: #{tpu_custom_call.1} parent=15 // pred_region
          %s337 = sld [smem:[#allocation3 + %s24]]
          %p338 = scmp.lt.s32.totalorder %s337, 2
          %s339 = scalar_select %p338, %s337, 2
          %s340 = smul.addr %s339, 7
          %s341 = smul.addr %s340, 8
          %s342 = scalar_lea.vmem %s6, %s341
          %s343 = sld [smem:[#allocation3 + %s24]]
        $region40: #{tpu_custom_call.1} parent=15 // pred_fallthru
          _
        // Predicated region
        $region41: #{tpu_custom_call.1} parent=15 // pred_check
          %p344 = pneg %p210
        $region42: #{tpu_custom_call.1} parent=15 // pred_check_branch
          %346 = sbr.rel (%p344) target = $region44
        $region43: #{tpu_custom_call.1} parent=15 // pred_region
          %s347 = sld [smem:[#allocation3 + %s24]]
          %p348 = scmp.lt.s32.totalorder %s347, 2
          %s349 = scalar_select %p348, %s347, 2
          %s350 = scalar_lea.vmem %s7, %s349
          %s351 = sld [smem:[#allocation3 + %s24]]
        $region44: #{tpu_custom_call.1} parent=15 // pred_fallthru
          _
        // Predicated region
        $region45: #{tpu_custom_call.1} parent=15 // pred_check
          %p352 = pneg %p238
        $region46: #{tpu_custom_call.1} parent=15 // pred_check_branch
          %354 = sbr.rel (%p352) target = $region48
        $region47: #{tpu_custom_call.1} parent=15 // pred_region
          %s355 = sld [smem:[#allocation3 + %s24]]
          %p356 = scmp.lt.s32.totalorder %s355, 2
          %s357 = scalar_select %p356, %s355, 2
          %s358 = scalar_lea.vmem %s8, %s357
          %s359 = sld [smem:[#allocation3 + %s24]]
        $region48: #{tpu_custom_call.1} parent=15 // pred_fallthru
          _
      $region16: #{tpu_custom_call.1} parent=5 // pred_fallthru
        _
      %p360 = scmp.le.s32.totalorder 1, %s24
      %p361 = scmp.lt.s32.totalorder %s24, 6
      %p362 = pnand %p360, %p361
      %p363 = pneg %p362
      // Predicated region
      $region49: #{tpu_custom_call.1} parent=5 // pred_check
        _
      $region50: #{tpu_custom_call.1} parent=5 // pred_check_branch
        %365 = sbr.rel (%p362) target = $region52
      $region51: #{tpu_custom_call.1} parent=5 // pred_region
        %s366 = ssub.s32 %s24, 1
        %s367 = smul.u32 16, %s29
        %p368 = scmp.lt.s32.totalorder %s367, 79
        %s369 = scalar_select %p368, %s367, 79
        %s370 = smul.addr %s369, 4
        %s371 = scalar_lea.vmem %s1, %s370
        %p372 = pneg %p50
        %p373 = pneg %p47
        %p374 = scmp.lt.s32.totalorder %s29, 4
        %s375 = scalar_select %p374, %s29, 4
        %s376 = scalar_lea.vmem %s2, %s375
        %p377 = pneg %p76
        %p378 = pneg %p73
        %s379 = sld [smem:[#allocation3 + %s29]]
        %p380 = scmp.lt.s32.totalorder %s379, 2
        %s381 = scalar_select %p380, %s379, 2
        %s382 = smul.addr %s381, 7
        %s383 = smul.addr %s382, 4
        %s384 = scalar_lea.vmem %s3, %s383
        %p385 = pneg %p104
        %p386 = pneg %p101
        %s387 = sld [smem:[#allocation3 + %s29]]
        %p388 = scmp.lt.s32.totalorder %s387, 2
        %s389 = scalar_select %p388, %s387, 2
        %s390 = smul.addr %s389, 7
        %s391 = smul.addr %s390, 8
        %s392 = scalar_lea.vmem %s4, %s391
        %p393 = pneg %p132
        %p394 = pneg %p129
        %s395 = sld [smem:[#allocation3 + %s29]]
        %p396 = scmp.lt.s32.totalorder %s395, 2
        %s397 = scalar_select %p396, %s395, 2
        %s398 = smul.addr %s397, 7
        %s399 = smul.addr %s398, 4
        %s400 = scalar_lea.vmem %s5, %s399
        %p401 = pneg %p160
        %p402 = pneg %p157
        %s403 = sld [smem:[#allocation3 + %s29]]
        %p404 = scmp.lt.s32.totalorder %s403, 2
        %s405 = scalar_select %p404, %s403, 2
        %s406 = smul.addr %s405, 7
        %s407 = smul.addr %s406, 8
        %s408 = scalar_lea.vmem %s6, %s407
        %p409 = pneg %p188
        %p410 = pneg %p185
        %s411 = sld [smem:[#allocation3 + %s29]]
        %p412 = scmp.lt.s32.totalorder %s411, 2
        %s413 = scalar_select %p412, %s411, 2
        %s414 = scalar_lea.vmem %s7, %s413
        %p415 = pneg %p216
        %p416 = pneg %p213
        %s417 = sld [smem:[#allocation3 + %s29]]
        %p418 = scmp.lt.s32.totalorder %s417, 2
        %s419 = scalar_select %p418, %s417, 2
        %s420 = scalar_lea.vmem %s8, %s419
        %p421 = pneg %p244
        %p422 = pneg %p241
        %p423 = pneg %p270
        %p424 = pneg %p267
        %s425 = sand.u32 %s257, 1
        %s426 = scalar_lea.sflag [#allocation5], %s425
        %s427 = sand.u32 %s257, 1
        %s428 = scalar_lea.vmem [#allocation4], %s427
        %s429 = smul.u32 16, %s29
        %p430 = scmp.lt.s32.totalorder %s429, 79
        %s431 = scalar_select %p430, %s429, 79
        %s432 = smul.addr %s431, 4
        %s433 = scalar_lea.vmem %s1, %s432
        %s434 = smul.u32 16, %s29
        %p435 = scmp.lt.s32.totalorder %s29, 4
        %s436 = scalar_select %p435, %s29, 4
        %s437 = scalar_lea.vmem %s2, %s436
        %s438 = sld [smem:[#allocation3 + %s29]]
        %p439 = scmp.lt.s32.totalorder %s438, 2
        %s440 = scalar_select %p439, %s438, 2
        %s441 = smul.addr %s440, 7
        %s442 = smul.addr %s441, 4
        %s443 = scalar_lea.vmem %s3, %s442
        %s444 = sld [smem:[#allocation3 + %s29]]
        %s445 = sld [smem:[#allocation3 + %s29]]
        %p446 = scmp.lt.s32.totalorder %s445, 2
        %s447 = scalar_select %p446, %s445, 2
        %s448 = smul.addr %s447, 7
        %s449 = smul.addr %s448, 8
        %s450 = scalar_lea.vmem %s4, %s449
        %s451 = sld [smem:[#allocation3 + %s29]]
        %s452 = sld [smem:[#allocation3 + %s29]]
        %p453 = scmp.lt.s32.totalorder %s452, 2
        %s454 = scalar_select %p453, %s452, 2
        %s455 = smul.addr %s454, 7
        %s456 = smul.addr %s455, 4
        %s457 = scalar_lea.vmem %s5, %s456
        %s458 = sld [smem:[#allocation3 + %s29]]
        %s459 = sld [smem:[#allocation3 + %s29]]
        %p460 = scmp.lt.s32.totalorder %s459, 2
        %s461 = scalar_select %p460, %s459, 2
        %s462 = smul.addr %s461, 7
        %s463 = smul.addr %s462, 8
        %s464 = scalar_lea.vmem %s6, %s463
        %s465 = sld [smem:[#allocation3 + %s29]]
        %s466 = sld [smem:[#allocation3 + %s29]]
        %p467 = scmp.lt.s32.totalorder %s466, 2
        %s468 = scalar_select %p467, %s466, 2
        %s469 = scalar_lea.vmem %s7, %s468
        %s470 = sld [smem:[#allocation3 + %s29]]
        %s471 = sld [smem:[#allocation3 + %s29]]
        %p472 = scmp.lt.s32.totalorder %s471, 2
        %s473 = scalar_select %p472, %s471, 2
        %s474 = scalar_lea.vmem %s8, %s473
        %s475 = sld [smem:[#allocation3 + %s29]]
        %v477 = vld [vmem:[%s433] sm:$0xf]
        %v478 = vld [vmem:[%s433 + $0x4] sm:$0xf]
        %v479 = vld [vmem:[%s433 + $0x8] sm:$0xf]
        %v480 = vld [vmem:[%s433 + $0xc] sm:$0xf]
        %v481 = vld [vmem:[%s433 + $0x10] sm:$0xf]
        %v482 = vld [vmem:[%s433 + $0x14] sm:$0xf]
        %v483 = vld [vmem:[%s433 + $0x18] sm:$0xf]
        %v484 = vld [vmem:[%s433 + $0x1c] sm:$0xf]
        %v485 = vld [vmem:[%s433 + $0x20] sm:$0xf]
        %v486 = vld [vmem:[%s433 + $0x24] sm:$0xf]
        %v487 = vld [vmem:[%s433 + $0x28] sm:$0xf]
        %v488 = vld [vmem:[%s433 + $0x2c] sm:$0xf]
        %v489 = vld [vmem:[%s433 + $0x30] sm:$0xf]
        %v490 = vld [vmem:[%s433 + $0x34] sm:$0xf]
        %v491 = vld [vmem:[%s433 + $0x38] sm:$0xf]
        %v492 = vld [vmem:[%s433 + $0x3c] sm:$0xf]
        %v493 = vld [vmem:[%s443] sm:$0xf]
        %v494 = vld [vmem:[%s443 + $0x4] sm:$0xf]
        %v495 = vld [vmem:[%s443 + $0x8] sm:$0xf]
        %v496 = vld [vmem:[%s443 + $0xc] sm:$0xf]
        %v497 = vld [vmem:[%s443 + $0x10] sm:$0xf]
        %v498 = vld [vmem:[%s443 + $0x14] sm:$0xf]
        %v499 = vld [vmem:[%s443 + $0x18] sm:$0x1]
        %v500 = vld [vmem:[%s450] sm:$0xff]
        %v501 = vld [vmem:[%s450 + $0x8] sm:$0xff]
        %v502 = vld [vmem:[%s450 + $0x10] sm:$0xff]
        %v503 = vld [vmem:[%s450 + $0x18] sm:$0xff]
        %v504 = vld [vmem:[%s450 + $0x20] sm:$0xff]
        %v505 = vld [vmem:[%s450 + $0x28] sm:$0xff]
        %v506 = vld [vmem:[%s450 + $0x30] sm:$0x3]
        %508 = vset.pattern.permute.xlu0 0
        %509 = vperm.xlu0 %508, %v500
        %v510 = vpop.permute.xlu0 %509
        %513 = vset.pattern.permute.xlu0 0
        %514 = vperm.xlu0 %513, %v501
        %v515 = vpop.permute.xlu0 %514
        %518 = vset.pattern.permute.xlu0 0
        %519 = vperm.xlu0 %518, %v502
        %v520 = vpop.permute.xlu0 %519
        %523 = vset.pattern.permute.xlu0 0
        %524 = vperm.xlu0 %523, %v503
        %v525 = vpop.permute.xlu0 %524
        %528 = vset.pattern.permute.xlu0 0
        %529 = vperm.xlu0 %528, %v504
        %v530 = vpop.permute.xlu0 %529
        %533 = vset.pattern.permute.xlu0 0
        %534 = vperm.xlu0 %533, %v505
        %v535 = vpop.permute.xlu0 %534
        %538 = vset.pattern.permute.xlu0 0
        %539 = vperm.xlu0 %538, %v506
        %v540 = vpop.permute.xlu0 %539
        %v549 = vunpack.c.l.b16 %v493
        %v550 = vunpack.c.l.b16 %v494
        %v551 = vunpack.c.l.b16 %v495
        %v552 = vunpack.c.l.b16 %v496
        %v553 = vunpack.c.l.b16 %v497
        %v554 = vunpack.c.l.b16 %v498
        %v555 = vunpack.c.l.b16 %v499
        %v556 = vpack.c.b16 %v550, %v549
        %v557 = vpack.c.b16 %v552, %v551
        %v558 = vpack.c.b16 %v554, %v553
        %v559 = vpack.c.b16 %v555, %v555
        %v576 = vunpack.c.l.b16 %v477
        %v577 = vunpack.c.l.b16 %v478
        %v578 = vunpack.c.l.b16 %v479
        %v579 = vunpack.c.l.b16 %v480
        %v580 = vunpack.c.l.b16 %v481
        %v581 = vunpack.c.l.b16 %v482
        %v582 = vunpack.c.l.b16 %v483
        %v583 = vunpack.c.l.b16 %v484
        %v584 = vunpack.c.l.b16 %v485
        %v585 = vunpack.c.l.b16 %v486
        %v586 = vunpack.c.l.b16 %v487
        %v587 = vunpack.c.l.b16 %v488
        %v588 = vunpack.c.l.b16 %v489
        %v589 = vunpack.c.l.b16 %v490
        %v590 = vunpack.c.l.b16 %v491
        %v591 = vunpack.c.l.b16 %v492
        %v592 = vpack.c.b16 %v577, %v576
        %v593 = vpack.c.b16 %v579, %v578
        %v594 = vpack.c.b16 %v581, %v580
        %v595 = vpack.c.b16 %v583, %v582
        %v596 = vpack.c.b16 %v585, %v584
        %v597 = vpack.c.b16 %v587, %v586
        %v598 = vpack.c.b16 %v589, %v588
        %v599 = vpack.c.b16 %v591, %v590
        %vm600 = vcmask 261120
        %v602 = vsel %vm600, %v556, 0
        %v605 = vsel %vm600, %v557, 0
        %v608 = vsel %vm600, %v558, 0
        %v611 = vsel %vm600, %v559, 0
        %v614 = vsel %vm600, %v592, 0
        %v617 = vsel %vm600, %v593, 0
        %v620 = vsel %vm600, %v594, 0
        %v623 = vsel %vm600, %v595, 0
        %v626 = vsel %vm600, %v596, 0
        %v629 = vsel %vm600, %v597, 0
        %v632 = vsel %vm600, %v598, 0
        %v635 = vsel %vm600, %v599, 0
        %637 = vmatprep.subr.bf16.mxu0 0
        %638 = vmatpush1.bf16.xpose.msra.mxu0 %v635
        %639 = vmatprep.subr.bf16.mxu0 0
        %640 = vmatpush1.bf16.xpose.msra.mxu0 %v632
        %641 = vmatprep.subr.bf16.mxu0 0
        %642 = vmatpush1.bf16.xpose.msra.mxu0 %v629
        %643 = vmatprep.subr.bf16.mxu0 0
        %644 = vmatpush1.bf16.xpose.msra.mxu0 %v626
        %645 = vmatprep.subr.bf16.mxu0 0
        %646 = vmatpush1.bf16.xpose.msra.mxu0 %v623
        %647 = vmatprep.subr.bf16.mxu0 0
        %648 = vmatpush1.bf16.xpose.msra.mxu0 %v620
        %649 = vmatprep.subr.bf16.mxu0 0
        %650 = vmatpush1.bf16.xpose.msra.mxu0 %v617
        %651 = vmatprep.subr.bf16.mxu0 0
        %652 = vmatpush1.bf16.xpose.msra.mxu0 %v614
        %653 = vmatprep.subr.bf16.mxu0 0
        %654 = vmatpush2.bf16.xpose.msra.mxu0 0
        %655 = vmatprep.subr.bf16.mxu0 0
        %656 = vmatpush2.bf16.xpose.msra.mxu0 0
        %657 = vmatprep.subr.bf16.mxu0 0
        %658 = vmatpush2.bf16.xpose.msra.mxu0 0
        %659 = vmatprep.subr.bf16.mxu0 0
        %660 = vmatpush2.bf16.xpose.msra.mxu0 0
        %661 = vmatprep.subr.bf16.mxu0 0
        %662 = vmatpush2.bf16.xpose.msra.mxu0 0
        %663 = vmatprep.subr.bf16.mxu0 0
        %664 = vmatpush2.bf16.xpose.msra.mxu0 0
        %665 = vmatprep.subr.bf16.mxu0 0
        %666 = vmatpush2.bf16.xpose.msra.mxu0 0
        %667 = vmatprep.subr.bf16.mxu0 0
        %668 = vmatpush2.bf16.xpose.msra.mxu0 0
        %669 = vmatprep.mubr.bf16.mxu0 0
        %670 = vmatmul.mubr.bf16.gmra.mxu0 %v602
        %v671 = vpop.f32.mrf.mxu0
        %v672 = vadd.f32 %v510, %v671
        %v673 = vpop.f32.mrf.mxu0
        %v674 = vpop.f32.mrf.mxu0
        %v675 = vadd.f32 %v515, %v674
        %v676 = vpop.f32.mrf.mxu0
        %677 = vmatprep.mubr.bf16.mxu0 0
        %678 = vmatmul.mubr.bf16.gmra.mxu0 %v605
        %v679 = vpop.f32.mrf.mxu0
        %v680 = vadd.f32 %v520, %v679
        %v681 = vpop.f32.mrf.mxu0
        %v682 = vpop.f32.mrf.mxu0
        %v683 = vadd.f32 %v525, %v682
        %v684 = vpop.f32.mrf.mxu0
        %685 = vmatprep.mubr.bf16.mxu0 0
        %686 = vmatmul.mubr.bf16.gmra.mxu0 %v608
        %v687 = vpop.f32.mrf.mxu0
        %v688 = vadd.f32 %v530, %v687
        %v689 = vpop.f32.mrf.mxu0
        %v690 = vpop.f32.mrf.mxu0
        %v691 = vadd.f32 %v535, %v690
        %v692 = vpop.f32.mrf.mxu0
        %693 = vmatprep.mubr.bf16.mxu0 0
        %694 = vmatmul.mubr.bf16.gmra.mxu0 %v611
        %v695 = vpop.f32.mrf.mxu0
        %v696 = vadd.f32 %v540, %v695
        %v697 = vpop.f32.mrf.mxu0
        %v698 = vpop.f32.mrf.mxu0
        %v699 = vpop.f32.mrf.mxu0
        %700 = vdwg.mxu0
        %v701 = vmax.f32 %v672, 0.0
        %v702 = vmax.f32 %v675, 0.0
        %v703 = vmax.f32 %v680, 0.0
        %v704 = vmax.f32 %v683, 0.0
        %v705 = vmax.f32 %v688, 0.0
        %v706 = vmax.f32 %v691, 0.0
        %v707 = vmax.f32 %v696, 0.0
        %v708 = vand.u32 2147483647, %v672
        %v709 = vand.u32 2147483647, %v675
        %v710 = vand.u32 2147483647, %v680
        %v711 = vand.u32 2147483647, %v683
        %v712 = vand.u32 2147483647, %v688
        %v713 = vand.u32 2147483647, %v691
        %v714 = vand.u32 2147483647, %v696
        %v715 = vsub.f32 0.0, %v708
        %v716 = vsub.f32 0.0, %v709
        %v717 = vsub.f32 0.0, %v710
        %v718 = vsub.f32 0.0, %v711
        %v719 = vsub.f32 0.0, %v712
        %v720 = vsub.f32 0.0, %v713
        %v721 = vsub.f32 0.0, %v714
        %v722 = vmul.f32 %v715, 1.442695
        %v723 = vpow.pop %v722
        %v724 = vmul.f32 %v716, 1.442695
        %v725 = vpow.pop %v724
        %v726 = vmul.f32 %v717, 1.442695
        %v727 = vpow.pop %v726
        %v728 = vmul.f32 %v718, 1.442695
        %v729 = vpow.pop %v728
        %v730 = vmul.f32 %v719, 1.442695
        %v731 = vpow.pop %v730
        %v732 = vmul.f32 %v720, 1.442695
        %v733 = vpow.pop %v732
        %v734 = vmul.f32 %v721, 1.442695
        %v735 = vpow.pop %v734
        %v736 = vadd.f32 %v723, 1.0
        %v737 = vlog2.pop %v736
        %v738 = vmul.f32 %v737, 0.6931472
        %v739 = vmul.f32 -0.5, %v723
        %v740 = vadd.f32 %v739, 1.0
        %v741 = vmul.f32 %v740, %v723
        %v742 = vand.u32 2147483647, %v723
        %vm743 = vcmp.lt.f32.partialorder %v742, 0.0004427343
        %v744 = vsel %vm743, %v741, %v738
        %v745 = vadd.f32 %v725, 1.0
        %v746 = vlog2.pop %v745
        %v747 = vmul.f32 %v746, 0.6931472
        %v748 = vmul.f32 -0.5, %v725
        %v749 = vadd.f32 %v748, 1.0
        %v750 = vmul.f32 %v749, %v725
        %v751 = vand.u32 2147483647, %v725
        %vm752 = vcmp.lt.f32.partialorder %v751, 0.0004427343
        %v753 = vsel %vm752, %v750, %v747
        %v754 = vadd.f32 %v727, 1.0
        %v755 = vlog2.pop %v754
        %v756 = vmul.f32 %v755, 0.6931472
        %v757 = vmul.f32 -0.5, %v727
        %v758 = vadd.f32 %v757, 1.0
        %v759 = vmul.f32 %v758, %v727
        %v760 = vand.u32 2147483647, %v727
        %vm761 = vcmp.lt.f32.partialorder %v760, 0.0004427343
        %v762 = vsel %vm761, %v759, %v756
        %v763 = vadd.f32 %v729, 1.0
        %v764 = vlog2.pop %v763
        %v765 = vmul.f32 %v764, 0.6931472
        %v766 = vmul.f32 -0.5, %v729
        %v767 = vadd.f32 %v766, 1.0
        %v768 = vmul.f32 %v767, %v729
        %v769 = vand.u32 2147483647, %v729
        %vm770 = vcmp.lt.f32.partialorder %v769, 0.0004427343
        %v771 = vsel %vm770, %v768, %v765
        %v772 = vadd.f32 %v731, 1.0
        %v773 = vlog2.pop %v772
        %v774 = vmul.f32 %v773, 0.6931472
        %v775 = vmul.f32 -0.5, %v731
        %v776 = vadd.f32 %v775, 1.0
        %v777 = vmul.f32 %v776, %v731
        %v778 = vand.u32 2147483647, %v731
        %vm779 = vcmp.lt.f32.partialorder %v778, 0.0004427343
        %v780 = vsel %vm779, %v777, %v774
        %v781 = vadd.f32 %v733, 1.0
        %v782 = vlog2.pop %v781
        %v783 = vmul.f32 %v782, 0.6931472
        %v784 = vmul.f32 -0.5, %v733
        %v785 = vadd.f32 %v784, 1.0
        %v786 = vmul.f32 %v785, %v733
        %v787 = vand.u32 2147483647, %v733
        %vm788 = vcmp.lt.f32.partialorder %v787, 0.0004427343
        %v789 = vsel %vm788, %v786, %v783
        %v790 = vadd.f32 %v735, 1.0
        %v791 = vlog2.pop %v790
        %v792 = vmul.f32 %v791, 0.6931472
        %v793 = vmul.f32 -0.5, %v735
        %v794 = vadd.f32 %v793, 1.0
        %v795 = vmul.f32 %v794, %v735
        %v796 = vand.u32 2147483647, %v735
        %vm797 = vcmp.lt.f32.partialorder %v796, 0.0004427343
        %v798 = vsel %vm797, %v795, %v792
        %v799 = vadd.f32 %v701, %v744
        %v800 = vadd.f32 %v702, %v753
        %v801 = vadd.f32 %v703, %v762
        %v802 = vadd.f32 %v704, %v771
        %v803 = vadd.f32 %v705, %v780
        %v804 = vadd.f32 %v706, %v789
        %v805 = vadd.f32 %v707, %v798
        %v806 = vsub.f32 %v799, 0.6931472
        %v807 = vsub.f32 %v800, 0.6931472
        %v808 = vsub.f32 %v801, 0.6931472
        %v809 = vsub.f32 %v802, 0.6931472
        %v810 = vsub.f32 %v803, 0.6931472
        %v811 = vsub.f32 %v804, 0.6931472
        %v812 = vsub.f32 %v805, 0.6931472
        %v813 = vld [vmem:[%s457] sm:$0xf]
        %v814 = vld [vmem:[%s457 + $0x4] sm:$0xf]
        %v815 = vld [vmem:[%s457 + $0x8] sm:$0xf]
        %v816 = vld [vmem:[%s457 + $0xc] sm:$0xf]
        %v817 = vld [vmem:[%s457 + $0x10] sm:$0xf]
        %v818 = vld [vmem:[%s457 + $0x14] sm:$0xf]
        %v819 = vld [vmem:[%s457 + $0x18] sm:$0x1]
        %v820 = vpack.c.bf16 %v807, %v806
        %v821 = vpack.c.bf16 %v809, %v808
        %v822 = vpack.c.bf16 %v811, %v810
        %v823 = vpack.c.bf16 %v812, %v812
        %v824 = vld [vmem:[%s464] sm:$0xff]
        %v825 = vld [vmem:[%s464 + $0x8] sm:$0xff]
        %v826 = vld [vmem:[%s464 + $0x10] sm:$0xff]
        %v827 = vld [vmem:[%s464 + $0x18] sm:$0xff]
        %v828 = vld [vmem:[%s464 + $0x20] sm:$0xff]
        %v829 = vld [vmem:[%s464 + $0x28] sm:$0xff]
        %v830 = vld [vmem:[%s464 + $0x30] sm:$0x3]
        %832 = vset.pattern.permute.xlu0 0
        %833 = vperm.xlu0 %832, %v824
        %v834 = vpop.permute.xlu0 %833
        %837 = vset.pattern.permute.xlu0 0
        %838 = vperm.xlu0 %837, %v825
        %v839 = vpop.permute.xlu0 %838
        %842 = vset.pattern.permute.xlu0 0
        %843 = vperm.xlu0 %842, %v826
        %v844 = vpop.permute.xlu0 %843
        %847 = vset.pattern.permute.xlu0 0
        %848 = vperm.xlu0 %847, %v827
        %v849 = vpop.permute.xlu0 %848
        %852 = vset.pattern.permute.xlu0 0
        %853 = vperm.xlu0 %852, %v828
        %v854 = vpop.permute.xlu0 %853
        %857 = vset.pattern.permute.xlu0 0
        %858 = vperm.xlu0 %857, %v829
        %v859 = vpop.permute.xlu0 %858
        %862 = vset.pattern.permute.xlu0 0
        %863 = vperm.xlu0 %862, %v830
        %v864 = vpop.permute.xlu0 %863
        %v873 = vunpack.c.l.b16 %v813
        %v874 = vunpack.c.l.b16 %v814
        %v875 = vunpack.c.l.b16 %v815
        %v876 = vunpack.c.l.b16 %v816
        %v877 = vunpack.c.l.b16 %v817
        %v878 = vunpack.c.l.b16 %v818
        %v879 = vunpack.c.l.b16 %v819
        %v880 = vpack.c.b16 %v874, %v873
        %v881 = vpack.c.b16 %v876, %v875
        %v882 = vpack.c.b16 %v878, %v877
        %v883 = vpack.c.b16 %v879, %v879
        %vm884 = vcmask 408576
        %v886 = vsel %vm884, %v880, 0
        %v889 = vsel %vm884, %v881, 0
        %v892 = vsel %vm884, %v882, 0
        %v895 = vsel %vm884, %v883, 0
        %vm897 = vcmask 1040384
        %v899 = vsel %vm897, %v823, 0
        %901 = vmatprep.subr.bf16.mxu0 0
        %902 = vmatpush1.bf16.msra.mxu0 0
        %903 = vmatprep.subr.bf16.mxu0 0
        %904 = vmatpush1.bf16.msra.mxu0 0
        %905 = vmatprep.subr.bf16.mxu0 0
        %906 = vmatpush1.bf16.msra.mxu0 0
        %907 = vmatprep.subr.bf16.mxu0 0
        %908 = vmatpush1.bf16.msra.mxu0 0
        %909 = vmatprep.subr.bf16.mxu0 0
        %910 = vmatpush1.bf16.msra.mxu0 %v899
        %911 = vmatprep.subr.bf16.mxu0 0
        %912 = vmatpush1.bf16.msra.mxu0 %v822
        %913 = vmatprep.subr.bf16.mxu0 0
        %914 = vmatpush1.bf16.msra.mxu0 %v821
        %915 = vmatprep.subr.bf16.mxu0 0
        %916 = vmatpush1.bf16.msra.mxu0 %v820
        %917 = vmatprep.subr.bf16.mxu0 0
        %918 = vmatpush2.bf16.msra.mxu0 0
        %919 = vmatprep.subr.bf16.mxu0 0
        %920 = vmatpush2.bf16.msra.mxu0 0
        %921 = vmatprep.subr.bf16.mxu0 0
        %922 = vmatpush2.bf16.msra.mxu0 0
        %923 = vmatprep.subr.bf16.mxu0 0
        %924 = vmatpush2.bf16.msra.mxu0 0
        %925 = vmatprep.subr.bf16.mxu0 0
        %926 = vmatpush2.bf16.msra.mxu0 0
        %927 = vmatprep.subr.bf16.mxu0 0
        %928 = vmatpush2.bf16.msra.mxu0 0
        %929 = vmatprep.subr.bf16.mxu0 0
        %930 = vmatpush2.bf16.msra.mxu0 0
        %931 = vmatprep.subr.bf16.mxu0 0
        %932 = vmatpush2.bf16.msra.mxu0 0
        %933 = vmatprep.mubr.bf16.mxu0 0
        %934 = vmatmul.mubr.bf16.gmra.mxu0 %v886
        %v935 = vpop.f32.mrf.mxu0
        %v936 = vadd.f32 %v834, %v935
        %v937 = vpop.f32.mrf.mxu0
        %v938 = vpop.f32.mrf.mxu0
        %v939 = vadd.f32 %v839, %v938
        %v940 = vpop.f32.mrf.mxu0
        %941 = vmatprep.mubr.bf16.mxu0 0
        %942 = vmatmul.mubr.bf16.gmra.mxu0 %v889
        %v943 = vpop.f32.mrf.mxu0
        %v944 = vadd.f32 %v844, %v943
        %v945 = vpop.f32.mrf.mxu0
        %v946 = vpop.f32.mrf.mxu0
        %v947 = vadd.f32 %v849, %v946
        %v948 = vpop.f32.mrf.mxu0
        %949 = vmatprep.mubr.bf16.mxu0 0
        %950 = vmatmul.mubr.bf16.gmra.mxu0 %v892
        %v951 = vpop.f32.mrf.mxu0
        %v952 = vadd.f32 %v854, %v951
        %v953 = vpop.f32.mrf.mxu0
        %v954 = vpop.f32.mrf.mxu0
        %v955 = vadd.f32 %v859, %v954
        %v956 = vpop.f32.mrf.mxu0
        %957 = vmatprep.mubr.bf16.mxu0 0
        %958 = vmatmul.mubr.bf16.gmra.mxu0 %v895
        %v959 = vpop.f32.mrf.mxu0
        %v960 = vadd.f32 %v864, %v959
        %v961 = vpop.f32.mrf.mxu0
        %v962 = vpop.f32.mrf.mxu0
        %v963 = vpop.f32.mrf.mxu0
        %964 = vdwg.mxu0
        %v965 = vmax.f32 %v936, 0.0
        %v966 = vmax.f32 %v939, 0.0
        %v967 = vmax.f32 %v944, 0.0
        %v968 = vmax.f32 %v947, 0.0
        %v969 = vmax.f32 %v952, 0.0
        %v970 = vmax.f32 %v955, 0.0
        %v971 = vmax.f32 %v960, 0.0
        %v972 = vand.u32 2147483647, %v936
        %v973 = vand.u32 2147483647, %v939
        %v974 = vand.u32 2147483647, %v944
        %v975 = vand.u32 2147483647, %v947
        %v976 = vand.u32 2147483647, %v952
        %v977 = vand.u32 2147483647, %v955
        %v978 = vand.u32 2147483647, %v960
        %v979 = vsub.f32 0.0, %v972
        %v980 = vsub.f32 0.0, %v973
        %v981 = vsub.f32 0.0, %v974
        %v982 = vsub.f32 0.0, %v975
        %v983 = vsub.f32 0.0, %v976
        %v984 = vsub.f32 0.0, %v977
        %v985 = vsub.f32 0.0, %v978
        %v986 = vmul.f32 %v979, 1.442695
        %v987 = vpow.pop %v986
        %v988 = vmul.f32 %v980, 1.442695
        %v989 = vpow.pop %v988
        %v990 = vmul.f32 %v981, 1.442695
        %v991 = vpow.pop %v990
        %v992 = vmul.f32 %v982, 1.442695
        %v993 = vpow.pop %v992
        %v994 = vmul.f32 %v983, 1.442695
        %v995 = vpow.pop %v994
        %v996 = vmul.f32 %v984, 1.442695
        %v997 = vpow.pop %v996
        %v998 = vmul.f32 %v985, 1.442695
        %v999 = vpow.pop %v998
        %v1000 = vadd.f32 %v987, 1.0
        %v1001 = vlog2.pop %v1000
        %v1002 = vmul.f32 %v1001, 0.6931472
        %v1003 = vmul.f32 -0.5, %v987
        %v1004 = vadd.f32 %v1003, 1.0
        %v1005 = vmul.f32 %v1004, %v987
        %v1006 = vand.u32 2147483647, %v987
        %vm1007 = vcmp.lt.f32.partialorder %v1006, 0.0004427343
        %v1008 = vsel %vm1007, %v1005, %v1002
        %v1009 = vadd.f32 %v989, 1.0
        %v1010 = vlog2.pop %v1009
        %v1011 = vmul.f32 %v1010, 0.6931472
        %v1012 = vmul.f32 -0.5, %v989
        %v1013 = vadd.f32 %v1012, 1.0
        %v1014 = vmul.f32 %v1013, %v989
        %v1015 = vand.u32 2147483647, %v989
        %vm1016 = vcmp.lt.f32.partialorder %v1015, 0.0004427343
        %v1017 = vsel %vm1016, %v1014, %v1011
        %v1018 = vadd.f32 %v991, 1.0
        %v1019 = vlog2.pop %v1018
        %v1020 = vmul.f32 %v1019, 0.6931472
        %v1021 = vmul.f32 -0.5, %v991
        %v1022 = vadd.f32 %v1021, 1.0
        %v1023 = vmul.f32 %v1022, %v991
        %v1024 = vand.u32 2147483647, %v991
        %vm1025 = vcmp.lt.f32.partialorder %v1024, 0.0004427343
        %v1026 = vsel %vm1025, %v1023, %v1020
        %v1027 = vadd.f32 %v993, 1.0
        %v1028 = vlog2.pop %v1027
        %v1029 = vmul.f32 %v1028, 0.6931472
        %v1030 = vmul.f32 -0.5, %v993
        %v1031 = vadd.f32 %v1030, 1.0
        %v1032 = vmul.f32 %v1031, %v993
        %v1033 = vand.u32 2147483647, %v993
        %vm1034 = vcmp.lt.f32.partialorder %v1033, 0.0004427343
        %v1035 = vsel %vm1034, %v1032, %v1029
        %v1036 = vadd.f32 %v995, 1.0
        %v1037 = vlog2.pop %v1036
        %v1038 = vmul.f32 %v1037, 0.6931472
        %v1039 = vmul.f32 -0.5, %v995
        %v1040 = vadd.f32 %v1039, 1.0
        %v1041 = vmul.f32 %v1040, %v995
        %v1042 = vand.u32 2147483647, %v995
        %vm1043 = vcmp.lt.f32.partialorder %v1042, 0.0004427343
        %v1044 = vsel %vm1043, %v1041, %v1038
        %v1045 = vadd.f32 %v997, 1.0
        %v1046 = vlog2.pop %v1045
        %v1047 = vmul.f32 %v1046, 0.6931472
        %v1048 = vmul.f32 -0.5, %v997
        %v1049 = vadd.f32 %v1048, 1.0
        %v1050 = vmul.f32 %v1049, %v997
        %v1051 = vand.u32 2147483647, %v997
        %vm1052 = vcmp.lt.f32.partialorder %v1051, 0.0004427343
        %v1053 = vsel %vm1052, %v1050, %v1047
        %v1054 = vadd.f32 %v999, 1.0
        %v1055 = vlog2.pop %v1054
        %v1056 = vmul.f32 %v1055, 0.6931472
        %v1057 = vmul.f32 -0.5, %v999
        %v1058 = vadd.f32 %v1057, 1.0
        %v1059 = vmul.f32 %v1058, %v999
        %v1060 = vand.u32 2147483647, %v999
        %vm1061 = vcmp.lt.f32.partialorder %v1060, 0.0004427343
        %v1062 = vsel %vm1061, %v1059, %v1056
        %v1063 = vadd.f32 %v965, %v1008
        %v1064 = vadd.f32 %v966, %v1017
        %v1065 = vadd.f32 %v967, %v1026
        %v1066 = vadd.f32 %v968, %v1035
        %v1067 = vadd.f32 %v969, %v1044
        %v1068 = vadd.f32 %v970, %v1053
        %v1069 = vadd.f32 %v971, %v1062
        %v1070 = vsub.f32 %v1063, 0.6931472
        %v1071 = vsub.f32 %v1064, 0.6931472
        %v1072 = vsub.f32 %v1065, 0.6931472
        %v1073 = vsub.f32 %v1066, 0.6931472
        %v1074 = vsub.f32 %v1067, 0.6931472
        %v1075 = vsub.f32 %v1068, 0.6931472
        %v1076 = vsub.f32 %v1069, 0.6931472
        %v1077 = vld [vmem:[%s469] sm:$0x1]
        %v1078 = vpack.c.bf16 %v1071, %v1070
        %v1079 = vpack.c.bf16 %v1073, %v1072
        %v1080 = vpack.c.bf16 %v1075, %v1074
        %v1081 = vpack.c.bf16 %v1076, %v1076
        %v1082 = vld [vmem:[%s474] sm:$0x1]
        %1084 = vset.pattern.permute.xlu0 0
        %1085 = vperm.xlu0 %1084, %v1082
        %v1086 = vpop.permute.xlu0 %1085
        %v1088 = vlaneseq
        %v1089 = vshrl.u32 %v1088, 7
        %v1090 = vsub.s32 0, %v1089
        %v1091 = vrot.slane %v1086, %v1090
        %v1093 = vsel %vm884, %v1077, 0
        %v1096 = vsel %vm897, %v1081, 0
        %1098 = vmatprep.subr.bf16.mxu0 0
        %1099 = vmatpush1.bf16.msra.mxu0 0
        %1100 = vmatprep.subr.bf16.mxu0 0
        %1101 = vmatpush1.bf16.msra.mxu0 0
        %1102 = vmatprep.subr.bf16.mxu0 0
        %1103 = vmatpush1.bf16.msra.mxu0 0
        %1104 = vmatprep.subr.bf16.mxu0 0
        %1105 = vmatpush1.bf16.msra.mxu0 0
        %1106 = vmatprep.subr.bf16.mxu0 0
        %1107 = vmatpush1.bf16.msra.mxu0 %v1096
        %1108 = vmatprep.subr.bf16.mxu0 0
        %1109 = vmatpush1.bf16.msra.mxu0 %v1080
        %1110 = vmatprep.subr.bf16.mxu0 0
        %1111 = vmatpush1.bf16.msra.mxu0 %v1079
        %1112 = vmatprep.subr.bf16.mxu0 0
        %1113 = vmatpush1.bf16.msra.mxu0 %v1078
        %1114 = vmatprep.subr.bf16.mxu0 0
        %1115 = vmatpush2.bf16.msra.mxu0 0
        %1116 = vmatprep.subr.bf16.mxu0 0
        %1117 = vmatpush2.bf16.msra.mxu0 0
        %1118 = vmatprep.subr.bf16.mxu0 0
        %1119 = vmatpush2.bf16.msra.mxu0 0
        %1120 = vmatprep.subr.bf16.mxu0 0
        %1121 = vmatpush2.bf16.msra.mxu0 0
        %1122 = vmatprep.subr.bf16.mxu0 0
        %1123 = vmatpush2.bf16.msra.mxu0 0
        %1124 = vmatprep.subr.bf16.mxu0 0
        %1125 = vmatpush2.bf16.msra.mxu0 0
        %1126 = vmatprep.subr.bf16.mxu0 0
        %1127 = vmatpush2.bf16.msra.mxu0 0
        %1128 = vmatprep.subr.bf16.mxu0 0
        %1129 = vmatpush2.bf16.msra.mxu0 0
        %1130 = vmatprep.mubr.bf16.mxu0 0
        %1131 = vmatmul.mubr.bf16.gmra.mxu0 %v1093
        %v1132 = vpop.f32.mrf.mxu0
        %v1133 = vadd.f32 %v1091, %v1132
        %v1134 = vpop.f32.mrf.mxu0
        %v1135 = vpop.f32.mrf.mxu0
        %v1136 = vpop.f32.mrf.mxu0
        %1137 = vdwg.mxu0
        %v1138 = vld [vmem:[%s437] sm:$0x1]
        %v1139 = vmul.f32 %v1138, %v1133
        %1140 = vst [vmem:[%s428] sm:$0x1] %v1139
        %s1141 = sand.u32 %s257, 1
        %s1142 = scalar_lea.sflag [#allocation5], %s1141
        %s1143 = sand.u32 %s257, 1
        %s1144 = scalar_lea.vmem [#allocation4], %s1143
        // Predicated region
        $region53: #{tpu_custom_call.1} parent=51 // pred_check
          %p1145 = pneg %p267
        $region54: #{tpu_custom_call.1} parent=51 // pred_check_branch
          %1147 = sbr.rel (%p1145) target = $region56
        $region55: #{tpu_custom_call.1} parent=51 // pred_region
          %s1149 = ssub.s32 16, 16
          %1150 = vsyncadd %s1142, %s1149
          %s1151 = smul.addr %s29, 16
          %s1152 = scalar_lea.hbm %s9, %s1151
          %s1154 = sshll.u32 %s1144, 4
          %s1155 = int_to_ptr.vmem [resolvable:$true] %s1154
          %1157 = dma.vmem_to_hbm [thread:$0]  %s1155, 16, %s1152, %s1142
        $region56: #{tpu_custom_call.1} parent=51 // pred_fallthru
          _
      $region52: #{tpu_custom_call.1} parent=5 // pred_fallthru
        _
      %p1158 = scmp.le.s32.totalorder 2, %s24
      // Predicated region
      $region57: #{tpu_custom_call.1} parent=5 // pred_check
        %p1159 = pneg %p1158
      $region58: #{tpu_custom_call.1} parent=5 // pred_check_branch
        %1161 = sbr.rel (%p1159) target = $region60
      $region59: #{tpu_custom_call.1} parent=5 // pred_region
        %s1162 = ssub.s32 %s24, 2
        // Predicated region
        $region61: #{tpu_custom_call.1} parent=59 // pred_check
          %p1163 = pneg %p273
        $region62: #{tpu_custom_call.1} parent=59 // pred_check_branch
          %1165 = sbr.rel (%p1163) target = $region64
        $region63: #{tpu_custom_call.1} parent=59 // pred_region
          %s1166 = sand.u32 %s258, 1
          %s1167 = scalar_lea.sflag [#allocation5], %s1166
          %s1168 = sand.u32 %s258, 1
          %s1169 = scalar_lea.vmem [#allocation4], %s1168
          %1170 = dma.done %s1167, 16
        $region64: #{tpu_custom_call.1} parent=59 // pred_fallthru
          _
      $region60: #{tpu_custom_call.1} parent=5 // pred_fallthru
        _
    $region6: #{tpu_custom_call.1} parent=1 // loop_footer
      %s28 = sadd.s32 1, %s24
    $region7: #{tpu_custom_call.1} parent=1 // loop_footer_branch
      %23 = sbr.rel target = $region3
    $region8: #{tpu_custom_call.1} parent=1 // loop_exit
      _
    %1171 = vsyncpa [#allocation5], 1
    %s1172 = scalar_lea.sflag [#allocation5], 1
    %1173 = vsyncpa %s1172, 1

</llo_original>
